<compile_context>
chip_gen: v5e
topology: v5e:2x2
jax: 0.10.0
libtpu: 0.0.40
codegen_flags: <defaults>
</compile_context>

<pallas_src>
import functools

import jax
import jax.numpy as jnp
import numpy as np
from jax.experimental import pallas as pl
from jax.experimental.pallas import tpu as pltpu


# ------------------------------- kernel --------------------------------------
def _phase_shuffle_kernel(k_ref, x_ref, o_ref, *, shift_factor):
    """Grid = (batch, channel-tiles).  k_ref: (N,) int32 in SMEM.
    x_ref / o_ref: (TC, L) tiles in VMEM."""
    b = pl.program_id(0)
    k = k_ref[b]                      # this sample's shift, scalar from SMEM
    x = x_ref[...]                    # (TC, L), loaded once
    L = x.shape[-1]

    def emit(s):
        @pl.when(k == s)
        def _():
            if s == 0:
                cand = x
            elif s > 0:
                # out[:, j] = x[:, s - j]  for j < s   (reflected prefix)
                #           = x[:, j - s]  otherwise
                left = [x[:, t:t + 1] for t in range(s, 0, -1)]
                cand = jnp.concatenate(left + [x[:, : L - s]], axis=1)
            else:
                m = -s
                # out[:, j] = x[:, j + m]            for j < L - m
                #           = x[:, 2L - 2 - j - m]   otherwise (reflected suffix)
                right = [x[:, L - 2 - p: L - 1 - p] for p in range(m)]
                cand = jnp.concatenate([x[:, m:]] + right, axis=1)
            o_ref[...] = cand          # lane-dense full-row store

    for s in range(-shift_factor, shift_factor + 1):
        emit(s)


# ------------------------------ tiling helper ---------------------------------
def _pick_c_tile(C, L, itemsize, budget_bytes=4 << 20):
    """Largest channel-tile that (a) divides C, (b) is a multiple of 8
    (sublane constraint) and (c) keeps one buffer under `budget_bytes`.
    Falls back to full C when C is not a multiple of 8 or already fits."""
    if C * L * itemsize <= budget_bytes or C % 8 != 0:
        return C
    best = 8
    d = 8
    while d <= C:
        if C % d == 0 and d * L * itemsize <= budget_bytes:
            best = d
        d += 8
    return best


# ------------------------------- wrapper --------------------------------------
def phase_shuffle(x, k, shift_factor, c_tile=None):
    """Pallas PhaseShuffle.
    x: (N, C, L) float array.  k: (N,) integer shifts in [-shift_factor, shift_factor]."""
    if shift_factor == 0:
        return x
    N, C, L = x.shape
    assert 2 * shift_factor < L, "reflection padding requires shift_factor << L"
    k = jnp.clip(k.astype(jnp.int32), -shift_factor, shift_factor)

    tc = _pick_c_tile(C, L, x.dtype.itemsize) if c_tile is None else c_tile
    assert C % tc == 0 and (tc == C or tc % 8 == 0), (C, tc)

    kernel = functools.partial(_phase_shuffle_kernel, shift_factor=shift_factor)

    return pl.pallas_call(
        kernel,
        out_shape=jax.ShapeDtypeStruct((N, C, L), x.dtype),
        grid_spec=pltpu.PrefetchScalarGridSpec(
            num_scalar_prefetch=1,                       # k -> SMEM
            grid=(N, C // tc),
            in_specs=[pl.BlockSpec((None, tc, L), lambda b, c, kref: (b, c, 0))],
            out_specs=pl.BlockSpec((None, tc, L), lambda b, c, kref: (b, c, 0)),
        ),
        compiler_params=pltpu.CompilerParams(
            dimension_semantics=("parallel", "parallel"),
        ),
    )(k, x)
    # TODO(synk): for very long L the (TC, L) block could additionally be tiled
    # along the lane axis (interior tiles only need a +/-shift_factor halo).


def phase_shuffle_random(x, key, shift_factor, batch_shuffle=False):
    """Convenience matching the module's forward(): draws the shifts itself."""
    # TODO(synk): the PyTorch module draws k with torch's RNG inside forward();
    # here k comes from a JAX PRNG key (same uniform {-n,...,n} distribution,
    # different bit stream).
    if shift_factor == 0:
        return x
    N = x.shape[0]
    if batch_shuffle:
        k = jnp.broadcast_to(
            jax.random.randint(key, (1,), -shift_factor, shift_factor + 1), (N,))
    else:
        k = jax.random.randint(key, (N,), -shift_factor, shift_factor + 1)
    return phase_shuffle(x, k, shift_factor)


# ------------------------- reference (mirrors torch) ---------------------------
def phase_shuffle_reference(x, k):
    x = np.asarray(x)
    k = np.asarray(k)
    out = np.empty_like(x)
    for i in range(x.shape[0]):
        ki = int(k[i])
        if ki == 0:
            out[i] = x[i]
        elif ki > 0:
            out[i] = np.pad(x[i][:, :-ki], ((0, 0), (ki, 0)), mode="reflect")
        else:
            out[i] = np.pad(x[i][:, -ki:], ((0, 0), (0, -ki)), mode="reflect")
    return out


# --------------------------------- main ----------------------------------------
if __name__ == "__main__":
    SHIFT = 2            # shift_factor
    B, C, L = 5, 8, 128  # small shapes; L multiple of 128 for lane-dense stores

    key = jax.random.PRNGKey(0)
    kx, kk, kx2 = jax.random.split(key, 3)
    x = jax.random.normal(kx, (B, C, L), jnp.float32)

    # 1) deterministic shifts covering every branch {-2, -1, 0, 1, 2}
    k_all = jnp.arange(-SHIFT, SHIFT + 1, dtype=jnp.int32)
    out = jax.block_until_ready(phase_shuffle(x, k_all, SHIFT))
    assert out.shape == x.shape, out.shape
    ref = phase_shuffle_reference(x, k_all)
    err = float(np.max(np.abs(np.asarray(out) - ref)))
    assert err == 0.0, f"max abs err {err}"          # pure data movement -> exact

    # 2) random per-sample shifts drawn like the module (uniform in [-n, n])
    k_rand = jax.random.randint(kk, (B,), -SHIFT, SHIFT + 1)
    out_r = jax.block_until_ready(phase_shuffle(x, k_rand, SHIFT))
    ref_r = phase_shuffle_reference(x, k_rand)
    err_r = float(np.max(np.abs(np.asarray(out_r) - ref_r)))
    assert err_r == 0.0, f"max abs err {err_r}"

    # 3) channel-tiled path (C split across the second grid axis)
    C2 = 16
    x2 = jax.random.normal(kx2, (B, C2, L), jnp.float32)
    out_t = jax.block_until_ready(phase_shuffle(x2, k_rand, SHIFT, c_tile=8))
    ref_t = phase_shuffle_reference(x2, k_rand)
    err_t = float(np.max(np.abs(np.asarray(out_t) - ref_t)))
    assert err_t == 0.0, f"max abs err {err_t}"

    # 4) batch_shuffle=True path (a single shift applied to the whole batch)
    out_b = jax.block_until_ready(
        phase_shuffle_random(x, kk, SHIFT, batch_shuffle=True))
    assert out_b.shape == x.shape

    print("KERNEL_OK")
</pallas_src>

<mosaic_0001>
module attributes {stable_mosaic.version = 11 : i64} {
  func.func @_phase_shuffle_kernel(%arg0: i32, %arg1: i32, %arg2: memref<5xi32, #tpu.memory_space<smem>>, %arg3: memref<1x8x128xf32, #tpu.memory_space<vmem>>, %arg4: memref<1x8x128xf32, #tpu.memory_space<vmem>>) attributes {dimension_semantics = [#tpu.dimension_semantics<parallel>, #tpu.dimension_semantics<parallel>], iteration_bounds = array<i64: 5, 1>, scalar_prefetch = 1 : i64, scratch_operands = 0 : i64, tpu.core_type = #tpu.core_type<tc>, window_params = [{transform_indices = @transform_0, window_bounds = array<i64: 1, 8, 128>}, {transform_indices = @transform_1, window_bounds = array<i64: 1, 8, 128>}]} {
    %0 = arith.index_cast %arg0 : i32 to index
    %1 = memref.load %arg2[%0] : memref<5xi32, #tpu.memory_space<smem>>
    %c0 = arith.constant 0 : index
    %c0_0 = arith.constant 0 : index
    %c0_1 = arith.constant 0 : index
    %2 = vector.load %arg3[%c0, %c0_0, %c0_1] : memref<1x8x128xf32, #tpu.memory_space<vmem>>, vector<1x8x128xf32>
    %3 = vector.shape_cast %2 : vector<1x8x128xf32> to vector<8x128xf32>
    %c-2_i32 = arith.constant -2 : i32
    %4 = arith.cmpi eq, %1, %c-2_i32 : i32
    %5 = arith.extui %4 : i1 to i32
    %c0_i32 = arith.constant 0 : i32
    %6 = arith.cmpi ne, %5, %c0_i32 : i32
    scf.if %6 {
      %19 = vector.extract_strided_slice %3 {offsets = [0, 126], sizes = [8, 1], strides = [1, 1]} : vector<8x128xf32> to vector<8x1xf32>
      %20 = vector.extract_strided_slice %3 {offsets = [0, 125], sizes = [8, 1], strides = [1, 1]} : vector<8x128xf32> to vector<8x1xf32>
      %21 = vector.extract_strided_slice %3 {offsets = [0, 2], sizes = [8, 126], strides = [1, 1]} : vector<8x128xf32> to vector<8x126xf32>
      %22 = tpu.concatenate %21, %19, %20 in 1 : vector<8x126xf32>, vector<8x1xf32>, vector<8x1xf32> -> vector<8x128xf32>
      %c0_7 = arith.constant 0 : index
      %c0_8 = arith.constant 0 : index
      %c0_9 = arith.constant 0 : index
      %23 = vector.load %arg4[%c0_7, %c0_8, %c0_9] : memref<1x8x128xf32, #tpu.memory_space<vmem>>, vector<1x8x128xf32>
      %24 = vector.shape_cast %23 : vector<1x8x128xf32> to vector<8x128xf32>
      %25 = vector.shape_cast %22 : vector<8x128xf32> to vector<1x8x128xf32>
      tpu.vector_store %arg4[%c0_7, %c0_8, %c0_9], %25 {strides = array<i32>} : memref<1x8x128xf32, #tpu.memory_space<vmem>>, vector<1x8x128xf32>,
    } else {
    }
    %c-1_i32 = arith.constant -1 : i32
    %7 = arith.cmpi eq, %1, %c-1_i32 : i32
    %8 = arith.extui %7 : i1 to i32
    %c0_i32_2 = arith.constant 0 : i32
    %9 = arith.cmpi ne, %8, %c0_i32_2 : i32
    scf.if %9 {
      %19 = vector.extract_strided_slice %3 {offsets = [0, 126], sizes = [8, 1], strides = [1, 1]} : vector<8x128xf32> to vector<8x1xf32>
      %20 = vector.extract_strided_slice %3 {offsets = [0, 1], sizes = [8, 127], strides = [1, 1]} : vector<8x128xf32> to vector<8x127xf32>
      %21 = tpu.concatenate %20, %19 in 1 : vector<8x127xf32>, vector<8x1xf32> -> vector<8x128xf32>
      %c0_7 = arith.constant 0 : index
      %c0_8 = arith.constant 0 : index
      %c0_9 = arith.constant 0 : index
      %22 = vector.load %arg4[%c0_7, %c0_8, %c0_9] : memref<1x8x128xf32, #tpu.memory_space<vmem>>, vector<1x8x128xf32>
      %23 = vector.shape_cast %22 : vector<1x8x128xf32> to vector<8x128xf32>
      %24 = vector.shape_cast %21 : vector<8x128xf32> to vector<1x8x128xf32>
      tpu.vector_store %arg4[%c0_7, %c0_8, %c0_9], %24 {strides = array<i32>} : memref<1x8x128xf32, #tpu.memory_space<vmem>>, vector<1x8x128xf32>,
    } else {
    }
    %c0_i32_3 = arith.constant 0 : i32
    %10 = arith.cmpi eq, %1, %c0_i32_3 : i32
    %11 = arith.extui %10 : i1 to i32
    %c0_i32_4 = arith.constant 0 : i32
    %12 = arith.cmpi ne, %11, %c0_i32_4 : i32
    scf.if %12 {
      %c0_7 = arith.constant 0 : index
      %c0_8 = arith.constant 0 : index
      %c0_9 = arith.constant 0 : index
      %19 = vector.load %arg4[%c0_7, %c0_8, %c0_9] : memref<1x8x128xf32, #tpu.memory_space<vmem>>, vector<1x8x128xf32>
      %20 = vector.shape_cast %19 : vector<1x8x128xf32> to vector<8x128xf32>
      %21 = vector.shape_cast %3 : vector<8x128xf32> to vector<1x8x128xf32>
      tpu.vector_store %arg4[%c0_7, %c0_8, %c0_9], %21 {strides = array<i32>} : memref<1x8x128xf32, #tpu.memory_space<vmem>>, vector<1x8x128xf32>,
    } else {
    }
    %c1_i32 = arith.constant 1 : i32
    %13 = arith.cmpi eq, %1, %c1_i32 : i32
    %14 = arith.extui %13 : i1 to i32
    %c0_i32_5 = arith.constant 0 : i32
    %15 = arith.cmpi ne, %14, %c0_i32_5 : i32
    scf.if %15 {
      %19 = vector.extract_strided_slice %3 {offsets = [0, 1], sizes = [8, 1], strides = [1, 1]} : vector<8x128xf32> to vector<8x1xf32>
      %20 = vector.extract_strided_slice %3 {offsets = [0, 0], sizes = [8, 127], strides = [1, 1]} : vector<8x128xf32> to vector<8x127xf32>
      %21 = tpu.concatenate %19, %20 in 1 : vector<8x1xf32>, vector<8x127xf32> -> vector<8x128xf32>
      %c0_7 = arith.constant 0 : index
      %c0_8 = arith.constant 0 : index
      %c0_9 = arith.constant 0 : index
      %22 = vector.load %arg4[%c0_7, %c0_8, %c0_9] : memref<1x8x128xf32, #tpu.memory_space<vmem>>, vector<1x8x128xf32>
      %23 = vector.shape_cast %22 : vector<1x8x128xf32> to vector<8x128xf32>
      %24 = vector.shape_cast %21 : vector<8x128xf32> to vector<1x8x128xf32>
      tpu.vector_store %arg4[%c0_7, %c0_8, %c0_9], %24 {strides = array<i32>} : memref<1x8x128xf32, #tpu.memory_space<vmem>>, vector<1x8x128xf32>,
    } else {
    }
    %c2_i32 = arith.constant 2 : i32
    %16 = arith.cmpi eq, %1, %c2_i32 : i32
    %17 = arith.extui %16 : i1 to i32
    %c0_i32_6 = arith.constant 0 : i32
    %18 = arith.cmpi ne, %17, %c0_i32_6 : i32
    scf.if %18 {
      %19 = vector.extract_strided_slice %3 {offsets = [0, 2], sizes = [8, 1], strides = [1, 1]} : vector<8x128xf32> to vector<8x1xf32>
      %20 = vector.extract_strided_slice %3 {offsets = [0, 1], sizes = [8, 1], strides = [1, 1]} : vector<8x128xf32> to vector<8x1xf32>
      %21 = vector.extract_strided_slice %3 {offsets = [0, 0], sizes = [8, 126], strides = [1, 1]} : vector<8x128xf32> to vector<8x126xf32>
      %22 = tpu.concatenate %19, %20, %21 in 1 : vector<8x1xf32>, vector<8x1xf32>, vector<8x126xf32> -> vector<8x128xf32>
      %c0_7 = arith.constant 0 : index
      %c0_8 = arith.constant 0 : index
      %c0_9 = arith.constant 0 : index
      %23 = vector.load %arg4[%c0_7, %c0_8, %c0_9] : memref<1x8x128xf32, #tpu.memory_space<vmem>>, vector<1x8x128xf32>
      %24 = vector.shape_cast %23 : vector<1x8x128xf32> to vector<8x128xf32>
      %25 = vector.shape_cast %22 : vector<8x128xf32> to vector<1x8x128xf32>
      tpu.vector_store %arg4[%c0_7, %c0_8, %c0_9], %25 {strides = array<i32>} : memref<1x8x128xf32, #tpu.memory_space<vmem>>, vector<1x8x128xf32>,
    } else {
    }
    return
  }
  func.func @transform_0(%arg0: i32, %arg1: i32, %arg2: memref<5xi32, #tpu.memory_space<smem>>) -> (i32, i32, i32) {
    %c0_i32 = arith.constant 0 : i32
    %c0_i32_0 = arith.constant 0 : i32
    return %arg0, %arg1, %c0_i32 : i32, i32, i32
  }
  func.func @transform_1(%arg0: i32, %arg1: i32, %arg2: memref<5xi32, #tpu.memory_space<smem>>) -> (i32, i32, i32) {
    %c0_i32 = arith.constant 0 : i32
    %c0_i32_0 = arith.constant 0 : i32
    return %arg0, %arg1, %c0_i32 : i32, i32, i32
  }
}

</mosaic_0001>

<llo_original>
// kernel: tpu_custom_call.1
$region0: #{tpu_custom_call.1}
  #allocation0 [shape = 'u32[]', space=smem, size = 0x4, offset = 0x4, fixed_abs, tag = 'smem constant byte address 0x4 - core index']
  #allocation1 [shape = 'u32[72,128]{1,0:T(1,128)}', space=vmem, size = 0x9000, scoped, tag = 'internal scratch']
  #allocation2 [shape = 's32[1]{0}', space=sflag, size = 0x4, scoped, tag = 'scoped memory for tpu_custom_call.1']
  #allocation3 [shape = 'u8[512]{0}', space=smem, size = 0x200, scoped, tag = 'prefetched SMEM operand 0']
  %s0 = inlined_call_operand.hbm [shape: s32[5], index: 0, kind: input, shape index: {}]
  %s1 = inlined_call_operand.hbm [shape: f32[5,8,128], index: 1, kind: input, shape index: {}]
  %s2 = inlined_call_operand.hbm [shape: f32[5,8,128], index: 2, kind: output, shape index: {}]
  %s3 = sld [smem:[#allocation0]]
  $region61: #{tpu_custom_call.1} parent=0
    _
  %s5 = ssub.s32 1, %s3
  %s6 = scalar_select 0, %s5, %s3
  %s8 = sshll.u32 %s0, 4
  %s9 = int_to_ptr.hbm [resolvable:$true] %s8
  %11 = dma.hbm_to_smem %s9, 16, [#allocation3], [#allocation2]
  %13 = dma.done [#allocation2], 16
  %14 = sfence
  $region1: #{tpu_custom_call.1} parent=0
    #allocation4 [shape = 'u8[8192]{0}', space=vmem, size = 0x2000, scoped, tag = 'input window, operand 1']
    #allocation5 [shape = 's32[2]{0}', space=sflag, size = 0x8, scoped, tag = 'scoped memory for tpu_custom_call.1']
    #allocation6 [shape = 's32[2]{0}', space=sflag, size = 0x8, scoped, tag = 'scoped memory for tpu_custom_call.1']
    #allocation7 [shape = 'u8[8192]{0}', space=vmem, size = 0x2000, scoped, tag = 'output window, operand 0']
    %15 = vsyncpa [#allocation5], 0
    %s16 = scalar_lea.sflag [#allocation5], 1
    %17 = vsyncpa %s16, 0
    %18 = vsyncpa [#allocation6], 0
    %s19 = scalar_lea.sflag [#allocation6], 1
    %20 = vsyncpa %s19, 0
    loop: start=0, step=1, limit=7
    $region2: #{tpu_custom_call.1} parent=1 // loop_pre_header
      _
    $region3: #{tpu_custom_call.1} parent=1 // loop_header
      %s22 = sphi 0, %s26
      %p23 = scmp.ge.s32.totalorder %s22, 7
      %s29 = sphi 0, %s41
      %s30 = sphi 0, %s37
      %s31 = sphi 0, %s29
      %s32 = sphi 0, %s30
      %s33 = sphi 0, %s31
      %s34 = sphi 0, %s32
      %s46 = sphi 0, %s48
      %s49 = sphi 0, %s46
      %s50 = sphi 0, %s49
      %s66 = sphi 0, %s50
      %s74 = sphi 0, %s76
      %s77 = sphi 0, %s74
      %s78 = sphi 0, %s77
      %s94 = sphi 0, %s78
    $region4: #{tpu_custom_call.1} parent=1 // loop_header_branch
      %25 = sbr.rel (%p23) target = $region8
    $region5: #{tpu_custom_call.1} parent=1 // loop_body
      %s27 = ssub.s32 %s22, 1
      %s28 = ssub.s32 %s22, 2
      %s35 = sadd.s32 1, %s30
      %p36 = scmp.ge.s32.totalorder %s35, 1
      %s37 = scalar_select %p36, 0, %s35
      %s38 = sadd.s32 1, %s29
      %s39 = scalar_select %p36, %s38, %s29
      %p40 = scmp.ge.s32.totalorder %s39, 5
      %s41 = scalar_select %p40, 0, %s39
      %s42 = ssub.s32 %s29, %s41
      %s43 = ssub.s32 %s30, %s37
      %s44 = sor.u32 %s42, %s43
      %p45 = scmp.eq.s32.totalorder %s44, 0
      %s47 = sadd.s32 %s46, 1
      %s48 = scalar_select %p45, %s46, %s47
      %p51 = pneg %p45
      %p52 = scmp.eq.s32.totalorder %s22, 4
      %p53 = por %p51, %p52
      %p54 = scmp.ne.s32.totalorder %s46, %s49
      %p55 = scmp.eq.s32.totalorder %s22, 0
      %p56 = por %p54, %p55
      %p57 = scmp.ne.s32.totalorder %s46, %s49
      %p58 = scmp.eq.s32.totalorder %s27, 4
      %p59 = por %p57, %p58
      %p60 = scmp.ne.s32.totalorder %s49, %s50
      %p61 = scmp.eq.s32.totalorder %s27, 0
      %p62 = por %p60, %p61
      %p63 = scmp.ne.s32.totalorder %s49, %s50
      %p64 = scmp.eq.s32.totalorder %s28, 4
      %p65 = por %p63, %p64
      %p67 = scmp.ne.s32.totalorder %s50, %s66
      %p68 = scmp.eq.s32.totalorder %s28, 0
      %p69 = por %p67, %p68
      %s70 = ssub.s32 %s29, %s41
      %s71 = ssub.s32 %s30, %s37
      %s72 = sor.u32 %s70, %s71
      %p73 = scmp.eq.s32.totalorder %s72, 0
      %s75 = sadd.s32 %s74, 1
      %s76 = scalar_select %p73, %s74, %s75
      %p79 = pneg %p73
      %p80 = scmp.eq.s32.totalorder %s22, 4
      %p81 = por %p79, %p80
      %p82 = scmp.ne.s32.totalorder %s74, %s77
      %p83 = scmp.eq.s32.totalorder %s22, 0
      %p84 = por %p82, %p83
      %p85 = scmp.ne.s32.totalorder %s74, %s77
      %p86 = scmp.eq.s32.totalorder %s27, 4
      %p87 = por %p85, %p86
      %p88 = scmp.ne.s32.totalorder %s77, %s78
      %p89 = scmp.eq.s32.totalorder %s27, 0
      %p90 = por %p88, %p89
      %p91 = scmp.ne.s32.totalorder %s77, %s78
      %p92 = scmp.eq.s32.totalorder %s28, 4
      %p93 = por %p91, %p92
      %p95 = scmp.ne.s32.totalorder %s78, %s94
      %p96 = scmp.eq.s32.totalorder %s28, 0
      %p97 = por %p95, %p96
      %p98 = scmp.le.s32.totalorder 1, %s22
      %p99 = scmp.lt.s32.totalorder %s22, 6
      %p100 = pnand %p98, %p99
      %p101 = pneg %p100
      // Predicated region
      $region9: #{tpu_custom_call.1} parent=5 // pred_check
        _
      $region10: #{tpu_custom_call.1} parent=5 // pred_check_branch
        %103 = sbr.rel (%p100) target = $region12
      $region11: #{tpu_custom_call.1} parent=5 // pred_region
        %s104 = ssub.s32 %s22, 1
      $region12: #{tpu_custom_call.1} parent=5 // pred_fallthru
        _
      %p105 = scmp.lt.s32.totalorder %s22, 5
      // Predicated region
      $region13: #{tpu_custom_call.1} parent=5 // pred_check
        %p106 = pneg %p105
      $region14: #{tpu_custom_call.1} parent=5 // pred_check_branch
        %108 = sbr.rel (%p106) target = $region16
      $region15: #{tpu_custom_call.1} parent=5 // pred_region
        // Predicated region
        $region17: #{tpu_custom_call.1} parent=15 // pred_check
          %p109 = pneg %p56
        $region18: #{tpu_custom_call.1} parent=15 // pred_check_branch
          %111 = sbr.rel (%p109) target = $region20
        $region19: #{tpu_custom_call.1} parent=15 // pred_region
          %s112 = sand.u32 %s46, 1
          %s113 = scalar_lea.sflag [#allocation5], %s112
          %s114 = sand.u32 %s46, 1
          %s115 = smul.addr %s114, 8
          %s116 = scalar_lea.vmem [#allocation4], %s115
          %118 = vsyncadd %s113, 0
          %s119 = sadd.s32 %s30, %s29
          %s120 = smul.addr %s119, 8
          %s121 = scalar_lea.hbm %s1, %s120
          %s123 = sshll.u32 %s121, 4
          %s124 = int_to_ptr.hbm [resolvable:$true] %s123
          %s125 = sshll.u32 %s116, 4
          %s126 = int_to_ptr.vmem [resolvable:$true] %s125
          %128 = dma.hbm_to_vmem [thread:$0]  %s124, 128, %s126, %s113
        $region20: #{tpu_custom_call.1} parent=15 // pred_fallthru
          _
      $region16: #{tpu_custom_call.1} parent=5 // pred_fallthru
        _
      %p129 = scmp.le.s32.totalorder 1, %s22
      %p130 = scmp.lt.s32.totalorder %s22, 6
      %p131 = pnand %p129, %p130
      %p132 = pneg %p131
      // Predicated region
      $region21: #{tpu_custom_call.1} parent=5 // pred_check
        _
      $region22: #{tpu_custom_call.1} parent=5 // pred_check_branch
        %134 = sbr.rel (%p131) target = $region24
      $region23: #{tpu_custom_call.1} parent=5 // pred_region
        %s135 = ssub.s32 %s22, 1
        %s136 = sand.u32 %s49, 1
        %s137 = scalar_lea.sflag [#allocation5], %s136
        %s138 = sand.u32 %s49, 1
        %s139 = smul.addr %s138, 8
        %s140 = scalar_lea.vmem [#allocation4], %s139
        // Predicated region
        $region25: #{tpu_custom_call.1} parent=23 // pred_check
          %p141 = pneg %p62
        $region26: #{tpu_custom_call.1} parent=23 // pred_check_branch
          %143 = sbr.rel (%p141) target = $region28
        $region27: #{tpu_custom_call.1} parent=23 // pred_region
          %145 = dma.done %s137, 128
        $region28: #{tpu_custom_call.1} parent=23 // pred_fallthru
          _
        %s146 = sand.u32 %s49, 1
        %s147 = scalar_lea.sflag [#allocation5], %s146
        %s148 = sand.u32 %s49, 1
        %s149 = smul.addr %s148, 8
        %s150 = scalar_lea.vmem [#allocation4], %s149
        %p151 = pneg %p62
        %p152 = pneg %p59
        %p153 = pneg %p90
        %p154 = pneg %p87
        %s155 = sand.u32 %s77, 1
        %s156 = scalar_lea.sflag [#allocation6], %s155
        %s157 = sand.u32 %s77, 1
        %s158 = smul.addr %s157, 8
        %s159 = scalar_lea.vmem [#allocation7], %s158
        %s160 = sld [smem:[#allocation3 + %s31]]
        %v161 = vld [vmem:[%s140] sm:$0xff]
        %p162 = scmp.eq.s32.totalorder %s160, 4294967294
        // Predicated region
        $region29: #{tpu_custom_call.1} parent=23 // pred_check
          %p163 = pneg %p162
        $region30: #{tpu_custom_call.1} parent=23 // pred_check_branch
          %165 = sbr.rel (%p163) target = $region32
        $region31: #{tpu_custom_call.1} parent=23 // pred_region
          %167 = vrot.lane.b32.xlu0 %v161, 126
          %v168 = vpop.permute.xlu0 %167
          %170 = vrot.lane.b32.xlu0 %v161, 2
          %v171 = vpop.permute.xlu0 %170
          %vm173 = vcmask 1031168
          %v174 = vsel %vm173, %v168, %v161
          %vm175 = vcmask 1039360
          %v176 = vsel %vm175, %v174, %v171
          %177 = vst [vmem:[%s159] sm:$0xff] %v176
        $region32: #{tpu_custom_call.1} parent=23 // pred_fallthru
          _
        %p178 = scmp.eq.s32.totalorder %s160, 4294967295
        // Predicated region
        $region33: #{tpu_custom_call.1} parent=23 // pred_check
          %p179 = pneg %p178
        $region34: #{tpu_custom_call.1} parent=23 // pred_check_branch
          %181 = sbr.rel (%p179) target = $region36
        $region35: #{tpu_custom_call.1} parent=23 // pred_region
          %183 = vrot.lane.b32.xlu0 %v161, 127
          %v184 = vpop.permute.xlu0 %183
          %186 = vrot.lane.b32.xlu0 %v161, 1
          %v187 = vpop.permute.xlu0 %186
          %vm189 = vcmask 1039360
          %v190 = vsel %vm189, %v184, %v187
          %191 = vst [vmem:[%s159] sm:$0xff] %v190
        $region36: #{tpu_custom_call.1} parent=23 // pred_fallthru
          _
        %p192 = scmp.eq.s32.totalorder %s160, 0
        // Predicated region
        $region37: #{tpu_custom_call.1} parent=23 // pred_check
          %p193 = pneg %p192
        $region38: #{tpu_custom_call.1} parent=23 // pred_check_branch
          %195 = sbr.rel (%p193) target = $region40
        $region39: #{tpu_custom_call.1} parent=23 // pred_region
          %196 = vst [vmem:[%s159] sm:$0xff] %v161
        $region40: #{tpu_custom_call.1} parent=23 // pred_fallthru
          _
        %p197 = scmp.eq.s32.totalorder %s160, 1
        // Predicated region
        $region41: #{tpu_custom_call.1} parent=23 // pred_check
          %p198 = pneg %p197
        $region42: #{tpu_custom_call.1} parent=23 // pred_check_branch
          %200 = sbr.rel (%p198) target = $region44
        $region43: #{tpu_custom_call.1} parent=23 // pred_region
          %202 = vrot.lane.b32.xlu0 %v161, 127
          %v203 = vpop.permute.xlu0 %202
          %205 = vrot.lane.b32.xlu0 %v161, 1
          %v206 = vpop.permute.xlu0 %205
          %vm208 = vcmask 7168
          %v209 = vsel %vm208, %v203, %v206
          %210 = vst [vmem:[%s159] sm:$0xff] %v209
        $region44: #{tpu_custom_call.1} parent=23 // pred_fallthru
          _
        %p211 = scmp.eq.s32.totalorder %s160, 2
        // Predicated region
        $region45: #{tpu_custom_call.1} parent=23 // pred_check
          %p212 = pneg %p211
        $region46: #{tpu_custom_call.1} parent=23 // pred_check_branch
          %214 = sbr.rel (%p212) target = $region48
        $region47: #{tpu_custom_call.1} parent=23 // pred_region
          %216 = vrot.lane.b32.xlu0 %v161, 126
          %v217 = vpop.permute.xlu0 %216
          %219 = vrot.lane.b32.xlu0 %v161, 2
          %v220 = vpop.permute.xlu0 %219
          %vm222 = vcmask 7168
          %v223 = vsel %vm222, %v217, %v161
          %vm224 = vcmask 15360
          %v225 = vsel %vm224, %v223, %v220
          %226 = vst [vmem:[%s159] sm:$0xff] %v225
        $region48: #{tpu_custom_call.1} parent=23 // pred_fallthru
          _
        %s227 = sand.u32 %s77, 1
        %s228 = scalar_lea.sflag [#allocation6], %s227
        %s229 = sand.u32 %s77, 1
        %s230 = smul.addr %s229, 8
        %s231 = scalar_lea.vmem [#allocation7], %s230
        // Predicated region
        $region49: #{tpu_custom_call.1} parent=23 // pred_check
          %p232 = pneg %p87
        $region50: #{tpu_custom_call.1} parent=23 // pred_check_branch
          %234 = sbr.rel (%p232) target = $region52
        $region51: #{tpu_custom_call.1} parent=23 // pred_region
          %236 = vsyncadd %s228, 0
          %s237 = sadd.s32 %s32, %s31
          %s238 = smul.addr %s237, 8
          %s239 = scalar_lea.hbm %s2, %s238
          %s241 = sshll.u32 %s231, 4
          %s242 = int_to_ptr.vmem [resolvable:$true] %s241
          %s243 = sshll.u32 %s239, 4
          %s244 = int_to_ptr.hbm [resolvable:$true] %s243
          %246 = dma.vmem_to_hbm [thread:$0]  %s242, 128, %s244, %s228
        $region52: #{tpu_custom_call.1} parent=23 // pred_fallthru
          _
      $region24: #{tpu_custom_call.1} parent=5 // pred_fallthru
        _
      %p247 = scmp.le.s32.totalorder 2, %s22
      // Predicated region
      $region53: #{tpu_custom_call.1} parent=5 // pred_check
        %p248 = pneg %p247
      $region54: #{tpu_custom_call.1} parent=5 // pred_check_branch
        %250 = sbr.rel (%p248) target = $region56
      $region55: #{tpu_custom_call.1} parent=5 // pred_region
        %s251 = ssub.s32 %s22, 2
        // Predicated region
        $region57: #{tpu_custom_call.1} parent=55 // pred_check
          %p252 = pneg %p93
        $region58: #{tpu_custom_call.1} parent=55 // pred_check_branch
          %254 = sbr.rel (%p252) target = $region60
        $region59: #{tpu_custom_call.1} parent=55 // pred_region
          %s255 = sand.u32 %s78, 1
          %s256 = scalar_lea.sflag [#allocation6], %s255
          %s257 = sand.u32 %s78, 1
          %s258 = smul.addr %s257, 8
          %s259 = scalar_lea.vmem [#allocation7], %s258
          %261 = dma.done %s256, 128
        $region60: #{tpu_custom_call.1} parent=55 // pred_fallthru
          _
      $region56: #{tpu_custom_call.1} parent=5 // pred_fallthru
        _
    $region6: #{tpu_custom_call.1} parent=1 // loop_footer
      %s26 = sadd.s32 1, %s22
    $region7: #{tpu_custom_call.1} parent=1 // loop_footer_branch
      %21 = sbr.rel target = $region3
    $region8: #{tpu_custom_call.1} parent=1 // loop_exit
      _
    %262 = vsyncpa [#allocation5], 1
    %s263 = scalar_lea.sflag [#allocation5], 1
    %264 = vsyncpa %s263, 1
    %265 = vsyncpa [#allocation6], 1
    %s266 = scalar_lea.sflag [#allocation6], 1
    %267 = vsyncpa %s266, 1

</llo_original>
